<compile_context>
chip_gen: v7x
topology: tpu7x:2x2x1
jax: 0.10.0
libtpu: 0.0.40
codegen_flags: <defaults>
</compile_context>

<pallas_src>
import jax
import jax.numpy as jnp
from jax.experimental import pallas as pl
from jax.experimental.pallas import tpu as pltpu


# ----------------------------------------------------------------------------
# small helpers
# ----------------------------------------------------------------------------
def _round_up(x, m):
    return (x + m - 1) // m * m


def _cdiv(a, b):
    return (a + b - 1) // b


def _stable_sigmoid(x):
    z = jnp.exp(-jnp.abs(x))
    return jnp.where(x >= 0.0, 1.0 / (1.0 + z), z / (1.0 + z))


def _stable_softplus(x):
    # softplus(x) = max(x,0) + log(1 + exp(-|x|))   (exp arg is <= 0, no overflow)
    return jnp.maximum(x, 0.0) + jnp.log(1.0 + jnp.exp(-jnp.abs(x)))


# ----------------------------------------------------------------------------
# Single-K-block GEMM with fused bias + activation (conv inner loop)
# ----------------------------------------------------------------------------
def _make_gemm_kernel(act):
    def kernel(a_ref, w_ref, b_ref, o_ref):
        y = jnp.dot(a_ref[...], w_ref[...], preferred_element_type=jnp.float32)
        y = y + b_ref[...]
        if act == "leaky":
            y = jnp.where(y >= 0.0, y, 0.2 * y)
        elif act == "relu":
            y = jnp.maximum(y, 0.0)
        o_ref[...] = y.astype(o_ref.dtype)

    return kernel


def _pick_m_tile(M, max_tile=512):
    """Largest tile (multiple of 16) that divides M exactly -> no pad copy."""
    for t in (512, 256, 128, 64, 32, 16):
        if t <= max_tile and M % t == 0:
            return t
    return None


def matmul_bias_act(a, w, b, act="none"):
    """(M,K) @ (K,N) + b with fused activation.

    bf16 MXU inputs, f32 accumulation in-register, bf16 output. Output N is
    padded to a multiple of 128 (lane-dense stores); callers keep the padded
    channel dim (padded lanes are exactly zero). K fits a single block for all
    layers in this module, so there is no K grid axis and no scratch
    accumulator.
    """
    M, K = a.shape
    _, N = w.shape

    tn = 128
    N_pad = _round_up(max(N, 1), tn)
    K_pad = _round_up(K, 16)                 # bf16 sublane-friendly single block
    assert K_pad <= 2048, "single-K-block GEMM assumes K <= 2048"

    tm = _pick_m_tile(M)
    if tm is None:
        tm = min(512, _round_up(M, 16))
    M_pad = _round_up(M, tm)

    a_p = a.astype(jnp.bfloat16)
    if (M_pad, K_pad) != (M, K):
        a_p = jnp.pad(a_p, ((0, M_pad - M), (0, K_pad - K)))
    w_p = w.astype(jnp.bfloat16)
    if (K_pad, N_pad) != (K, N):
        w_p = jnp.pad(w_p, ((0, K_pad - K), (0, N_pad - N)))
    b_p = b.astype(jnp.float32)
    if N_pad != N:
        b_p = jnp.pad(b_p, (0, N_pad - N))
    b_p = b_p.reshape(1, N_pad)

    grid = (M_pad // tm, N_pad // tn)
    flops = 2 * M * K * N                                        # real flops
    bytes_accessed = M * K * 2 + K * N * 2 + N * 4 + M * N * 2   # real bytes

    out = pl.pallas_call(
        _make_gemm_kernel(act),
        out_shape=jax.ShapeDtypeStruct((M_pad, N_pad), jnp.bfloat16),
        grid=grid,
        in_specs=[
            pl.BlockSpec((tm, K_pad), lambda i, j: (i, 0)),
            pl.BlockSpec((K_pad, tn), lambda i, j: (0, j)),
            pl.BlockSpec((1, tn), lambda i, j: (0, j)),
        ],
        out_specs=pl.BlockSpec((tm, tn), lambda i, j: (i, j)),
        compiler_params=pltpu.CompilerParams(
            dimension_semantics=("parallel", "parallel"),
            vmem_limit_bytes=32 * 1024 * 1024),
        cost_estimate=pl.CostEstimate(flops=flops, transcendentals=0,
                                      bytes_accessed=bytes_accessed),
    )(a_p, w_p, b_p)
    if M_pad != M:
        out = out[:M]
    return out                # (M, N_pad) bf16, lane-dense channel dim


# ----------------------------------------------------------------------------
# Grid-tiled masked scalar reductions (L1, GAN losses)
#   - (8,128) VMEM vector accumulator, VPU adds per tile,
#   - tail mask only on the last grid step,
#   - single cross-lane reduce in the finalize step.
# ----------------------------------------------------------------------------
def _make_masked_sum_kernel(fn, count, tr, n_in):
    def kernel(*refs):
        in_refs = refs[:n_in]
        o_ref = refs[n_in]
        acc_ref = refs[n_in + 1]
        step = pl.program_id(0)
        nsteps = pl.num_programs(0)

        @pl.when(step == 0)
        def _():
            acc_ref[...] = jnp.zeros_like(acc_ref)

        vals = fn(*[r[...].astype(jnp.float32) for r in in_refs])   # (tr,128)

        @pl.when(step < nsteps - 1)                 # interior tiles: no mask
        def _():
            acc_ref[...] += jnp.sum(vals.reshape(tr // 8, 8, 128), axis=0)

        @pl.when(step == nsteps - 1)                # last tile: mask the tail
        def _():
            base = step * (tr * 128)
            idx = (base
                   + jax.lax.broadcasted_iota(jnp.int32, (tr, 128), 0) * 128
                   + jax.lax.broadcasted_iota(jnp.int32, (tr, 128), 1))
            masked = jnp.where(idx < count, vals, 0.0)
            acc_ref[...] += jnp.sum(masked.reshape(tr // 8, 8, 128), axis=0)
            o_ref[...] = jnp.reshape(jnp.sum(acc_ref[...]), (1, 1))

    return kernel


def _reduce_mean(fn, *arrays):
    """mean over all elements of elementwise fn(*arrays), lane-dense layout."""
    flats = [a.reshape(-1) for a in arrays]
    count = flats[0].size
    rows = _cdiv(count, 128)
    tr = min(512, _round_up(rows, 8))
    rows_pad = _round_up(rows, tr)
    total = rows_pad * 128
    padded = [jnp.pad(f, (0, total - count)).reshape(rows_pad, 128)
              for f in flats]
    out = pl.pallas_call(
        _make_masked_sum_kernel(fn, count, tr, len(arrays)),
        out_shape=jax.ShapeDtypeStruct((1, 1), jnp.float32),
        grid=(rows_pad // tr,),
        in_specs=[pl.BlockSpec((tr, 128), lambda i: (i, 0))] * len(arrays),
        out_specs=pl.BlockSpec((1, 1), lambda i: (0, 0)),
        scratch_shapes=[pltpu.VMEM((8, 128), jnp.float32)],
        compiler_params=pltpu.CompilerParams(
            dimension_semantics=("arbitrary",),
            vmem_limit_bytes=32 * 1024 * 1024),
    )(*padded)
    return out[0, 0] / count


def l1_mean(x, y):
    return _reduce_mean(lambda a, b: jnp.abs(a - b), x, y)


def hinge_g_loss(logits_fake):
    return _reduce_mean(lambda f: -f, logits_fake)


def bce_gen_loss(logits_fake):
    return _reduce_mean(lambda f: -jnp.log(_stable_sigmoid(f) + 1e-10),
                        logits_fake)


def hinge_d_loss(logits_real, logits_fake):
    return _reduce_mean(
        lambda r, f: 0.5 * (jnp.maximum(1.0 - r, 0.0) + jnp.maximum(1.0 + f, 0.0)),
        logits_real, logits_fake)


def vanilla_d_loss(logits_real, logits_fake):
    return _reduce_mean(
        lambda r, f: 0.5 * (_stable_softplus(-r) + _stable_softplus(f)),
        logits_real, logits_fake)


def bce_discr_loss(logits_real, logits_fake):
    # matches reference: mean( -log(1-sigmoid(fake)+eps) - log(sigmoid(real)+eps) )
    return _reduce_mean(
        lambda r, f: (-jnp.log(1.0 - _stable_sigmoid(f) + 1e-10)
                      - jnp.log(_stable_sigmoid(r) + 1e-10)),
        logits_real, logits_fake)


# ----------------------------------------------------------------------------
# LPIPS per-stage distance (channel-normalized, lin-weighted, spatial+batch mean)
# ----------------------------------------------------------------------------
def _make_lpips_stage_kernel(tr, c):
    def kernel(fx_ref, fy_ref, w_ref, o_ref, acc_ref):
        step = pl.program_id(0)

        @pl.when(step == 0)
        def _():
            acc_ref[...] = jnp.zeros_like(acc_ref)

        eps = 1e-10
        fx = fx_ref[...].astype(jnp.float32)   # (tr, c) padded channels are 0
        fy = fy_ref[...].astype(jnp.float32)
        w = w_ref[...]                          # (1, c)  padded lin weights are 0
        # reference LPIPS normalize_tensor: x / (sqrt(sum(x^2)) + eps)
        nx = fx / (jnp.sqrt(jnp.sum(fx * fx, axis=-1, keepdims=True)) + eps)
        ny = fy / (jnp.sqrt(jnp.sum(fy * fy, axis=-1, keepdims=True)) + eps)
        d = ((nx - ny) ** 2) * w
        acc_ref[...] += jnp.sum(d.reshape(tr // 8, 8, c), axis=0)

        @pl.when(step == pl.num_programs(0) - 1)
        def _():
            o_ref[...] = jnp.reshape(jnp.sum(acc_ref[...]), (1, 1))

    return kernel


def lpips_stage_mean(fx, fy, lin_w):
    """Mean over batch+space of sum_c lin_w_c * (norm(fx)-norm(fy))^2."""
    n, h, w_, c = fx.shape                 # c is the lane-padded channel dim
    pix = n * h * w_
    fx2 = fx.reshape(pix, c)               # bf16, read as-is (upcast in-kernel)
    fy2 = fy.reshape(pix, c)
    tr = min(512, _round_up(pix, 8))
    pix_pad = _round_up(pix, tr)
    if pix_pad != pix:                     # padded rows are all-zero -> d == 0
        fx2 = jnp.pad(fx2, ((0, pix_pad - pix), (0, 0)))
        fy2 = jnp.pad(fy2, ((0, pix_pad - pix), (0, 0)))
    wpad = jnp.zeros((1, c), jnp.float32).at[0, :lin_w.shape[0]].set(
        lin_w.astype(jnp.float32))

    out = pl.pallas_call(
        _make_lpips_stage_kernel(tr, c),
        out_shape=jax.ShapeDtypeStruct((1, 1), jnp.float32),
        grid=(pix_pad // tr,),
        in_specs=[pl.BlockSpec((tr, c), lambda i: (i, 0)),
                  pl.BlockSpec((tr, c), lambda i: (i, 0)),
                  pl.BlockSpec((1, c), lambda i: (0, 0))],
        out_specs=pl.BlockSpec((1, 1), lambda i: (0, 0)),
        scratch_shapes=[pltpu.VMEM((8, c), jnp.float32)],
        compiler_params=pltpu.CompilerParams(
            dimension_semantics=("arbitrary",),
            vmem_limit_bytes=32 * 1024 * 1024),
    )(fx2, fy2, wpad)
    return out[0, 0] / pix


# ----------------------------------------------------------------------------
# Convolution = im2col (JAX glue, bf16) + tiled Pallas GEMM
# ----------------------------------------------------------------------------
def _im2col(x, kh, kw, stride, pad):
    # x: (N, H, W, C) -> (N*oh*ow, kh*kw*C)
    xp = jnp.pad(x, ((0, 0), (pad, pad), (pad, pad), (0, 0)))
    n, hp, wp, c = xp.shape
    oh = (hp - kh) // stride + 1
    ow = (wp - kw) // stride + 1
    patches = []
    for i in range(kh):
        for j in range(kw):
            patches.append(xp[:, i:i + stride * oh:stride,
                               j:j + stride * ow:stride, :])
    p = jnp.stack(patches, axis=3)            # (N, oh, ow, kh*kw, C)
    return p.reshape(n * oh * ow, kh * kw * c), oh, ow


def conv2d(x, w, b, stride, pad, act="none"):
    # x: (N,H,W,C_phys) where only the first cin channels are real,
    # w: (kh,kw,cin,cout), b: (cout,).  Output channel dim lane-padded to 128,
    # output dtype bf16 (padded channels are exactly zero).
    n = x.shape[0]
    kh, kw, cin, cout = w.shape
    x_real = x[..., :cin].astype(jnp.bfloat16)   # drop padded channels pre-im2col
    cols, oh, ow = _im2col(x_real, kh, kw, stride, pad)
    y = matmul_bias_act(cols, w.reshape(kh * kw * cin, cout), b, act=act)
    return y.reshape(n, oh, ow, -1)


# ----------------------------------------------------------------------------
# LPIPS-lite and PatchGAN-lite discriminator (deterministic synthetic weights)
# ----------------------------------------------------------------------------
# TODO(synk): real LPIPS uses a pretrained VGG16 + learned linear heads loaded
# from a checkpoint; here it is a small deterministic conv stack with the same
# distance semantics (channel-normalized, squared, lin-weighted, mean).
def lpips_forward(p, x, y):
    n = x.shape[0]
    xy = jnp.concatenate([x, y], axis=0)      # batch x and y through one pass
    f1 = conv2d(xy, p["w1"], p["b1"], stride=1, pad=1, act="relu")
    f2 = conv2d(f1, p["w2"], p["b2"], stride=2, pad=1, act="relu")
    f3 = conv2d(f2, p["w3"], p["b3"], stride=2, pad=1, act="relu")
    d = (lpips_stage_mean(f1[:n], f1[n:], p["lin1"])
         + lpips_stage_mean(f2[:n], f2[n:], p["lin2"])
         + lpips_stage_mean(f3[:n], f3[n:], p["lin3"]))
    return d  # scalar: batch-mean perceptual distance


# TODO(synk): BatchNorm layers of NLayerDiscriminator are omitted (synthetic
# weights, eval-style behaviour folded away).
def discriminator_forward(p, x):
    h = conv2d(x, p["w1"], p["b1"], stride=2, pad=1, act="leaky")
    h = conv2d(h, p["w2"], p["b2"], stride=2, pad=1, act="leaky")
    h = conv2d(h, p["w3"], p["b3"], stride=1, pad=1, act="none")
    return h[..., 0]   # (N, oh, ow) patch logits (lane 0; padded lanes are 0)


def init_params(key):
    ks = jax.random.split(key, 9)
    norm = lambda k, s, sc: sc * jax.random.normal(k, s, jnp.float32)
    lpips = {
        "w1": norm(ks[0], (3, 3, 3, 8), 0.2), "b1": jnp.zeros((8,), jnp.float32),
        "w2": norm(ks[1], (3, 3, 8, 16), 0.2), "b2": jnp.zeros((16,), jnp.float32),
        "w3": norm(ks[2], (3, 3, 16, 32), 0.2), "b3": jnp.zeros((32,), jnp.float32),
        "lin1": jnp.abs(norm(ks[3], (8,), 1.0)),
        "lin2": jnp.abs(norm(ks[4], (16,), 1.0)),
        "lin3": jnp.abs(norm(ks[5], (32,), 1.0)),
    }
    disc = {
        "w1": norm(ks[6], (4, 4, 3, 16), 0.02), "b1": jnp.zeros((16,), jnp.float32),
        "w2": norm(ks[7], (4, 4, 16, 32), 0.02), "b2": jnp.zeros((32,), jnp.float32),
        "w3": norm(ks[8], (4, 4, 32, 1), 0.02), "b3": jnp.zeros((1,), jnp.float32),
    }
    return {"lpips": lpips, "disc": disc}


# ----------------------------------------------------------------------------
# VQLPIPSWithDiscriminator (forward semantics)
# ----------------------------------------------------------------------------
def adopt_weight(weight, global_step, threshold=0, value=0.0):
    if isinstance(global_step, (int, float)):
        return value if global_step < threshold else weight
    return jnp.where(global_step < threshold, value, weight)


class VQLPIPSWithDiscriminator:
    def __init__(self, disc_start, params, codebook_weight=1.0,
                 pixelloss_weight=1.0, disc_factor=1.0, disc_weight=1.0,
                 perceptual_weight=1.0, disc_conditional=False,
                 disc_adaptive_loss=False, disc_loss="hinge",
                 disc_weight_max=1.0):
        assert disc_loss in ["hinge", "vanilla", "bce"]
        self.codebook_weight = codebook_weight
        self.pixel_weight = pixelloss_weight
        self.perceptual_weight = perceptual_weight
        self.discriminator_iter_start = disc_start
        self.disc_factor = disc_factor
        self.discriminator_weight = disc_weight
        self.disc_conditional = disc_conditional
        self.disc_adaptive_loss = disc_adaptive_loss
        self.disc_weight_max = disc_weight_max
        self.params = params
        if disc_loss == "hinge":
            self.disc_loss = hinge_d_loss
            self.gen_loss = hinge_g_loss
        elif disc_loss == "vanilla":
            self.disc_loss = vanilla_d_loss
            self.gen_loss = hinge_g_loss
        else:
            self.disc_loss = bce_discr_loss
            self.gen_loss = bce_gen_loss
        # TODO(synk): calculate_adaptive_weight needs autograd through the
        # generator's last layer; this setup runs with disc_adaptive_loss=False
        # so d_weight = disc_weight_max (the module's non-adaptive branch).

    def __call__(self, codebook_loss, inputs, reconstructions, optimizer_idx,
                 global_step, last_layer=None, cond=None, split="train",
                 gate=None):
        # NCHW -> NHWC (kernel layout)
        x = jnp.transpose(inputs, (0, 2, 3, 1)).astype(jnp.float32)
        xr = jnp.transpose(reconstructions, (0, 2, 3, 1)).astype(jnp.float32)
        n = x.shape[0]

        rec_l1_mean = l1_mean(x, xr)
        if self.perceptual_weight > 0:
            p_loss_mean = lpips_forward(self.params["lpips"], x, xr)
        else:
            p_loss_mean = jnp.float32(0.0)
        # mean(|x-xr| + w * p_loss broadcast) == mean(|x-xr|) + w * mean(p_loss)
        nll_loss = rec_l1_mean + self.perceptual_weight * p_loss_mean
        rec_loss_mean = nll_loss

        if optimizer_idx == 0:
            assert cond is None and not self.disc_conditional
            logits_fake = discriminator_forward(self.params["disc"], xr)
            g_loss = self.gen_loss(logits_fake)
            d_weight = jnp.float32(self.disc_weight_max)   # non-adaptive branch
            disc_factor = adopt_weight(self.disc_factor, global_step,
                                       threshold=self.discriminator_iter_start)
            loss = (nll_loss + d_weight * disc_factor * g_loss
                    + self.codebook_weight * jnp.mean(codebook_loss))
            log = {
                f"{split}_total_loss": loss,
                f"{split}_quant_loss": jnp.mean(codebook_loss),
                f"{split}_nll_loss": nll_loss,
                f"{split}_rec_loss": rec_loss_mean,
                f"{split}_p_loss": p_loss_mean,
                f"{split}_d_weight": d_weight,
                f"{split}_disc_factor": jnp.float32(disc_factor),
                f"{split}_g_loss": g_loss,
            }
            return loss, log

        if optimizer_idx == 1:
            xd = jax.lax.stop_gradient(x)
            xrd = jax.lax.stop_gradient(xr)
            both = jnp.concatenate([xd, xrd], axis=0)   # one disc pass for both
            logits = discriminator_forward(self.params["disc"], both)
            logits_real, logits_fake = logits[:n], logits[n:]
            disc_factor = adopt_weight(self.disc_factor, global_step,
                                       threshold=self.discriminator_iter_start)
            d_loss = disc_factor * self.disc_loss(logits_real, logits_fake)
            log = {
                f"{split}_disc_loss": d_loss,
                f"{split}_logits_real": jnp.mean(logits_real.astype(jnp.float32)),
                f"{split}_logits_fake": jnp.mean(logits_fake.astype(jnp.float32)),
            }
            return d_loss, log


# ----------------------------------------------------------------------------
# Demo
# ----------------------------------------------------------------------------
if __name__ == "__main__":
    key = jax.random.PRNGKey(0)
    k_in, k_rec, k_cb = jax.random.split(key, 3)

    # PyTorch-style NCHW inputs (small: batch=2, 3 channels, 16x16).
    inputs = jax.random.normal(k_in, (2, 3, 16, 16), jnp.float32)
    reconstructions = inputs + 0.1 * jax.random.normal(k_rec, (2, 3, 16, 16),
                                                       jnp.float32)
    codebook_loss = jax.random.uniform(k_cb, (2,), jnp.float32)

    params = init_params(jax.random.PRNGKey(42))
    loss_mod = VQLPIPSWithDiscriminator(
        disc_start=50, params=params, codebook_weight=1.0, disc_factor=1.0,
        disc_weight=1.0, perceptual_weight=1.0, disc_adaptive_loss=False,
        disc_loss="hinge", disc_weight_max=1.0)

    # generator update (optimizer_idx=0) past the discriminator warm-up
    g_total, g_log = loss_mod(codebook_loss, inputs, reconstructions,
                              optimizer_idx=0, global_step=100)
    # discriminator update (optimizer_idx=1)
    d_total, d_log = loss_mod(codebook_loss, inputs, reconstructions,
                              optimizer_idx=1, global_step=100)

    jax.block_until_ready((g_total, d_total, g_log, d_log))
    print("KERNEL_OK")
</pallas_src>

<mosaic_0001>
module attributes {stable_mosaic.version = 11 : i64} {
  func.func @kernel(%arg0: i32, %arg1: memref<16x128xf32, #tpu.memory_space<vmem>>, %arg2: memref<16x128xf32, #tpu.memory_space<vmem>>, %arg3: memref<1x1xf32, #tpu.memory_space<vmem>>, %arg4: memref<8x128xf32, #tpu.memory_space<vmem>>) attributes {dimension_semantics = [#tpu.dimension_semantics<arbitrary>], iteration_bounds = array<i64: 1>, scalar_prefetch = 0 : i64, scratch_operands = 1 : i64, tpu.core_type = #tpu.core_type<tc>, window_params = [{transform_indices = @transform_0, window_bounds = array<i64: 16, 128>}, {transform_indices = @transform_1, window_bounds = array<i64: 16, 128>}, {pipeline_mode = #tpu.pipeline_mode<synchronous>, transform_indices = @transform_2, window_bounds = array<i64: 1, 1>}]} {
    %c0_i32 = arith.constant 0 : i32
    %0 = arith.cmpi eq, %arg0, %c0_i32 : i32
    %1 = arith.extui %0 : i1 to i32
    %c0_i32_0 = arith.constant 0 : i32
    %2 = arith.cmpi ne, %1, %c0_i32_0 : i32
    scf.if %2 {
      %cst = arith.constant 0.000000e+00 : f32
      %13 = vector.broadcast %cst : f32 to vector<8x128xf32>
      %c0_8 = arith.constant 0 : index
      %c0_9 = arith.constant 0 : index
      %14 = vector.load %arg4[%c0_8, %c0_9] : memref<8x128xf32, #tpu.memory_space<vmem>>, vector<8x128xf32>
      tpu.vector_store %arg4[%c0_8, %c0_9], %13 {strides = array<i32>} : memref<8x128xf32, #tpu.memory_space<vmem>>, vector<8x128xf32>,
    } else {
    }
    %c0 = arith.constant 0 : index
    %c0_1 = arith.constant 0 : index
    %3 = vector.load %arg1[%c0, %c0_1] : memref<16x128xf32, #tpu.memory_space<vmem>>, vector<16x128xf32>
    %c0_2 = arith.constant 0 : index
    %c0_3 = arith.constant 0 : index
    %4 = vector.load %arg2[%c0_2, %c0_3] : memref<16x128xf32, #tpu.memory_space<vmem>>, vector<16x128xf32>
    %5 = arith.subf %3, %4 : vector<16x128xf32>
    %6 = math.absf %5 : vector<16x128xf32>
    %c0_i32_4 = arith.constant 0 : i32
    %7 = arith.cmpi slt, %arg0, %c0_i32_4 : i32
    %8 = arith.extui %7 : i1 to i32
    %c0_i32_5 = arith.constant 0 : i32
    %9 = arith.cmpi ne, %8, %c0_i32_5 : i32
    scf.if %9 {
      %c0_8 = arith.constant 0 : index
      %c0_9 = arith.constant 0 : index
      %13 = vector.load %arg4[%c0_8, %c0_9] : memref<8x128xf32, #tpu.memory_space<vmem>>, vector<8x128xf32>
      %14 = vector.shape_cast %6 : vector<16x128xf32> to vector<2x8x128xf32>
      %cst = arith.constant dense<0.000000e+00> : vector<8x128xf32>
      %15 = vector.multi_reduction <add>, %14, %cst [0] : vector<2x8x128xf32> to vector<8x128xf32>
      %16 = arith.addf %13, %15 : vector<8x128xf32>
      %c0_10 = arith.constant 0 : index
      %c0_11 = arith.constant 0 : index
      %17 = vector.load %arg4[%c0_10, %c0_11] : memref<8x128xf32, #tpu.memory_space<vmem>>, vector<8x128xf32>
      tpu.vector_store %arg4[%c0_10, %c0_11], %16 {strides = array<i32>} : memref<8x128xf32, #tpu.memory_space<vmem>>, vector<8x128xf32>,
    } else {
    }
    %c0_i32_6 = arith.constant 0 : i32
    %10 = arith.cmpi eq, %arg0, %c0_i32_6 : i32
    %11 = arith.extui %10 : i1 to i32
    %c0_i32_7 = arith.constant 0 : i32
    %12 = arith.cmpi ne, %11, %c0_i32_7 : i32
    scf.if %12 {
      %c2048_i32 = arith.constant 2048 : i32
      %13 = arith.muli %arg0, %c2048_i32 : i32
      %14 = tpu.iota {dimensions = array<i32: 0>} : vector<16x128xi32>
      %c128_i32 = arith.constant 128 : i32
      %15 = vector.broadcast %c128_i32 : i32 to vector<16x128xi32>
      %16 = arith.muli %14, %15 : vector<16x128xi32>
      %17 = vector.broadcast %13 : i32 to vector<16x128xi32>
      %18 = arith.addi %17, %16 : vector<16x128xi32>
      %19 = tpu.iota {dimensions = array<i32: 1>} : vector<16x128xi32>
      %20 = arith.addi %18, %19 : vector<16x128xi32>
      %c1536_i32 = arith.constant 1536 : i32
      %21 = vector.broadcast %c1536_i32 : i32 to vector<16x128xi32>
      %22 = arith.cmpi slt, %20, %21 : vector<16x128xi32>
      %cst = arith.constant 0.000000e+00 : f32
      %23 = vector.broadcast %cst : f32 to vector<16x128xf32>
      %24 = arith.select %22, %6, %23 : vector<16x128xi1>, vector<16x128xf32>
      %c0_8 = arith.constant 0 : index
      %c0_9 = arith.constant 0 : index
      %25 = vector.load %arg4[%c0_8, %c0_9] : memref<8x128xf32, #tpu.memory_space<vmem>>, vector<8x128xf32>
      %26 = vector.shape_cast %24 : vector<16x128xf32> to vector<2x8x128xf32>
      %cst_10 = arith.constant dense<0.000000e+00> : vector<8x128xf32>
      %27 = vector.multi_reduction <add>, %26, %cst_10 [0] : vector<2x8x128xf32> to vector<8x128xf32>
      %28 = arith.addf %25, %27 : vector<8x128xf32>
      %c0_11 = arith.constant 0 : index
      %c0_12 = arith.constant 0 : index
      %29 = vector.load %arg4[%c0_11, %c0_12] : memref<8x128xf32, #tpu.memory_space<vmem>>, vector<8x128xf32>
      tpu.vector_store %arg4[%c0_11, %c0_12], %28 {strides = array<i32>} : memref<8x128xf32, #tpu.memory_space<vmem>>, vector<8x128xf32>,
      %c0_13 = arith.constant 0 : index
      %c0_14 = arith.constant 0 : index
      %30 = vector.load %arg4[%c0_13, %c0_14] : memref<8x128xf32, #tpu.memory_space<vmem>>, vector<8x128xf32>
      %31 = vector.shape_cast %30 : vector<8x128xf32> to vector<1x8x128xf32>
      %cst_15 = arith.constant dense<0.000000e+00> : vector<1xf32>
      %32 = vector.multi_reduction <add>, %31, %cst_15 [1, 2] : vector<1x8x128xf32> to vector<1xf32>
      %33 = vector.shape_cast %32 : vector<1xf32> to vector<1x1x1xf32>
      %34 = vector.extract %33[0, 0, 0] : f32 from vector<1x1x1xf32>
      %35 = vector.broadcast %34 : f32 to vector<1x1xf32>
      %c0_16 = arith.constant 0 : index
      %c0_17 = arith.constant 0 : index
      %36 = vector.load %arg3[%c0_16, %c0_17] : memref<1x1xf32, #tpu.memory_space<vmem>>, vector<1x1xf32>
      tpu.vector_store %arg3[%c0_16, %c0_17], %35 {strides = array<i32>} : memref<1x1xf32, #tpu.memory_space<vmem>>, vector<1x1xf32>,
    } else {
    }
    return
  }
  func.func @transform_0(%arg0: i32) -> (i32, i32) {
    %c0_i32 = arith.constant 0 : i32
    %c0_i32_0 = arith.constant 0 : i32
    return %arg0, %c0_i32 : i32, i32
  }
  func.func @transform_1(%arg0: i32) -> (i32, i32) {
    %c0_i32 = arith.constant 0 : i32
    %c0_i32_0 = arith.constant 0 : i32
    return %arg0, %c0_i32 : i32, i32
  }
  func.func @transform_2(%arg0: i32) -> (i32, i32) {
    %c0_i32 = arith.constant 0 : i32
    %c0_i32_0 = arith.constant 0 : i32
    %c0_i32_1 = arith.constant 0 : i32
    return %c0_i32, %c0_i32_0 : i32, i32
  }
}

</mosaic_0001>

<llo_original>
// kernel: tpu_custom_call.1
$region0: #{tpu_custom_call.1}
  #allocation0 [shape = 'u32[]', space=smem, size = 0x4, offset = 0x4, fixed_abs, tag = 'smem constant byte address 0x4 - core index']
  #allocation1 [shape = 'u32[144,128]{1,0:T(1,128)}', space=vmem, size = 0x12000, scoped, tag = 'internal scratch']
  #allocation2 [shape = 'f32[8,128]{1,0:T(8,128)}', space=vmem, size = 0x1000, scoped, tag = 'scratch operand']
  %s0 = inlined_call_operand.hbm [shape: f32[16,128], index: 0, kind: input, shape index: {}]
  %s1 = inlined_call_operand.hbm [shape: f32[16,128], index: 1, kind: input, shape index: {}]
  %s2 = inlined_call_operand.hbm [shape: f32[1,1], index: 2, kind: output, shape index: {}]
  %s3 = sld [smem:[#allocation0]]
  $region38: #{tpu_custom_call.1} parent=0
    _
  %s5 = ssub.s32 1, %s3
  %s6 = scalar_select 0, %s5, %s3
  $region1: #{tpu_custom_call.1} parent=0
    #allocation3 [shape = 'u8[8192]{0}', space=vmem, size = 0x2000, scoped, tag = 'input window, operand 0, single buffered']
    #allocation4 [shape = 's32[1]{0}', space=sflag, size = 0x4, scoped, tag = 'scoped memory for tpu_custom_call.1']
    #allocation5 [shape = 's32[1]{0}', space=sflag, size = 0x4, scoped, tag = 'scoped memory for tpu_custom_call.1']
    #allocation6 [shape = 'u8[8192]{0}', space=vmem, size = 0x2000, scoped, tag = 'input window, operand 1, single buffered']
    #allocation7 [shape = 's32[1]{0}', space=sflag, size = 0x4, scoped, tag = 'scoped memory for tpu_custom_call.1']
    #allocation8 [shape = 'u8[512]{0}', space=vmem, size = 0x400, scoped, tag = 'output window, operand 0, single buffered']
    %7 = vsyncpa [#allocation4], 0
    %8 = vsyncpa [#allocation7], 0
    %9 = vsyncpa [#allocation5], 0
    // Predicated region
    $region2: #{tpu_custom_call.1} parent=1 // pred_check
      _
    $region3: #{tpu_custom_call.1} parent=1 // pred_check_branch
      %11 = sbr.rel (0) target = $region5
    $region4: #{tpu_custom_call.1} parent=1 // pred_region
      %s13 = ssub.s32 256, 256
      %14 = vsyncadd [#allocation4], %s13
      %s15 = sshll.u32 [#allocation3], 4
      %s16 = int_to_ptr.vmem [resolvable:$true] %s15
      %21 = dma.hbm_to_vmem [thread:$0]  %s0, 256, %s16, [#allocation4], 128, 128, 8
    $region5: #{tpu_custom_call.1} parent=1 // pred_fallthru
      _
    // Predicated region
    $region6: #{tpu_custom_call.1} parent=1 // pred_check
      _
    $region7: #{tpu_custom_call.1} parent=1 // pred_check_branch
      %23 = sbr.rel (0) target = $region9
    $region8: #{tpu_custom_call.1} parent=1 // pred_region
      %s25 = ssub.s32 256, 256
      %26 = vsyncadd [#allocation7], %s25
      %s27 = sshll.u32 [#allocation6], 4
      %s28 = int_to_ptr.vmem [resolvable:$true] %s27
      %33 = dma.hbm_to_vmem [thread:$0]  %s1, 256, %s28, [#allocation7], 128, 128, 8
    $region9: #{tpu_custom_call.1} parent=1 // pred_fallthru
      _
    // Predicated region
    $region10: #{tpu_custom_call.1} parent=1 // pred_check
      _
    $region11: #{tpu_custom_call.1} parent=1 // pred_check_branch
      %35 = sbr.rel (0) target = $region13
    $region12: #{tpu_custom_call.1} parent=1 // pred_region
      %36 = dma.done [#allocation4], 256
    $region13: #{tpu_custom_call.1} parent=1 // pred_fallthru
      _
    // Predicated region
    $region14: #{tpu_custom_call.1} parent=1 // pred_check
      _
    $region15: #{tpu_custom_call.1} parent=1 // pred_check_branch
      %38 = sbr.rel (0) target = $region17
    $region16: #{tpu_custom_call.1} parent=1 // pred_region
      %39 = dma.done [#allocation7], 256
    $region17: #{tpu_custom_call.1} parent=1 // pred_fallthru
      _
    %p40 = scmp.eq.s32.totalorder 0, 0
    // Predicated region
    $region18: #{tpu_custom_call.1} parent=1 // pred_check
      %p41 = pneg %p40
    $region19: #{tpu_custom_call.1} parent=1 // pred_check_branch
      %43 = sbr.rel (%p41) target = $region21
    $region20: #{tpu_custom_call.1} parent=1 // pred_region
      %44 = vst [vmem:[#allocation2] sm:$0xff] 0.0
    $region21: #{tpu_custom_call.1} parent=1 // pred_fallthru
      _
    %v45 = vld [vmem:[#allocation3] sm:$0xff]
    %v46 = vld [vmem:[#allocation3 + $0x8] sm:$0xff]
    %v47 = vld [vmem:[#allocation6] sm:$0xff]
    %v48 = vld [vmem:[#allocation6 + $0x8] sm:$0xff]
    %v49 = vsub.f32 %v45, %v47
    %v50 = vsub.f32 %v46, %v48
    %v51 = vand.u32 2147483647, %v49
    %v52 = vand.u32 2147483647, %v50
    %p53 = scmp.lt.s32.totalorder 0, 0
    // Predicated region
    $region22: #{tpu_custom_call.1} parent=1 // pred_check
      %p54 = pneg %p53
    $region23: #{tpu_custom_call.1} parent=1 // pred_check_branch
      %56 = sbr.rel (%p54) target = $region25
    $region24: #{tpu_custom_call.1} parent=1 // pred_region
      %v57 = vld [vmem:[#allocation2] sm:$0xff]
      %v58 = vadd.f32 %v51, %v52
      %v59 = vadd.f32 %v57, %v58
      %60 = vst [vmem:[#allocation2] sm:$0xff] %v59
    $region25: #{tpu_custom_call.1} parent=1 // pred_fallthru
      _
    // Predicated region
    $region26: #{tpu_custom_call.1} parent=1 // pred_check
      %p61 = pneg %p40
    $region27: #{tpu_custom_call.1} parent=1 // pred_check_branch
      %63 = sbr.rel (%p61) target = $region29
    $region28: #{tpu_custom_call.1} parent=1 // pred_region
      %s64 = smul.u32 0, 2048
      %v65 = vlaneseq
      %v66 = vshrl.u32 %v65, 7
      %v67 = vadd.s32 %v66, 8
      %v68 = vmul.u32 %v66, 128
      %v69 = vmul.u32 %v67, 128
      %v70 = vstv %s64
      %v71 = vadd.s32 %v70, %v68
      %v72 = vadd.s32 %v70, %v69
      %v73 = vlaneseq
      %v74 = vand.u32 %v73, 127
      %v75 = vadd.s32 %v71, %v74
      %v76 = vadd.s32 %v72, %v74
      %vm77 = vcmp.lt.s32.totalorder %v75, 1536
      %vm78 = vcmp.lt.s32.totalorder %v76, 1536
      %v79 = vsel %vm77, %v51, 0.0
      %v80 = vsel %vm78, %v52, 0.0
      %v81 = vld [vmem:[#allocation2] sm:$0xff]
      %v82 = vadd.f32 %v79, %v80
      %v83 = vadd.f32 %v81, %v82
      %84 = vst [vmem:[#allocation2] sm:$0xff] %v83
      %v85 = vld [vmem:[#allocation2] sm:$0xff]
      %86 = vadd.xlane.f32.xlu0 %v85
      %v87 = vpop.xlane.xlu0 %86
      %v88 = vrot.slane %v87, 4
      %v89 = vadd.f32 %v87, %v88
      %v90 = vrot.slane %v89, 2
      %v91 = vadd.f32 %v89, %v90
      %v92 = vrot.slane %v91, 1
      %v93 = vadd.f32 %v91, %v92
      %s94 = vtos %v93
      %v95 = vstv %s94
      %vm96 = vcmask 0
      %97 = vst.msk [vmem:[#allocation8] sm:$0x1] %vm96, %v95
    $region29: #{tpu_custom_call.1} parent=1 // pred_fallthru
      _
    // Predicated region
    $region30: #{tpu_custom_call.1} parent=1 // pred_check
      _
    $region31: #{tpu_custom_call.1} parent=1 // pred_check_branch
      %99 = sbr.rel (0) target = $region33
    $region32: #{tpu_custom_call.1} parent=1 // pred_region
      %s101 = ssub.s32 16, 16
      %102 = vsyncadd [#allocation5], %s101
      %s104 = sshll.u32 [#allocation8], 4
      %s105 = int_to_ptr.vmem [resolvable:$true] %s104
      %107 = dma.vmem_to_hbm [thread:$0]  %s105, 16, %s2, [#allocation5]
    $region33: #{tpu_custom_call.1} parent=1 // pred_fallthru
      _
    // Predicated region
    $region34: #{tpu_custom_call.1} parent=1 // pred_check
      _
    $region35: #{tpu_custom_call.1} parent=1 // pred_check_branch
      %109 = sbr.rel (0) target = $region37
    $region36: #{tpu_custom_call.1} parent=1 // pred_region
      %110 = dma.done [#allocation5], 16
    $region37: #{tpu_custom_call.1} parent=1 // pred_fallthru
      _
    %111 = vsyncpa [#allocation4], 1
    %112 = vsyncpa [#allocation7], 1
    %113 = vsyncpa [#allocation5], 1

</llo_original>
